<compile_context>
chip_gen: v7x
topology: tpu7x:2x2x1
jax: 0.10.0
libtpu: 0.0.40
codegen_flags: <defaults>
</compile_context>

<pallas_src>
import functools

import jax
import jax.numpy as jnp
from jax.experimental import pallas as pl
from jax.experimental.pallas import tpu as pltpu


def _round_up(a, b):
    return -(-a // b) * b


def _gap_linear_kernel(x_ref, wmax_ref, wavg_ref, b_ref, o_ref,
                       max_acc, sum_acc, *, hw, rem, needs_mask):
    # x_ref   : (TN, C, THW)   input block (spatial axis last = lane-dense)
    # wmax_ref: (C, out_ch)    weight columns for the max-pooled half
    # wavg_ref: (C, out_ch)    weight columns for the avg-pooled half
    # b_ref   : (1, out_ch)
    # o_ref   : (TN, out_ch)
    # max_acc / sum_acc : (TN, C) f32 VMEM scratch accumulators
    k = pl.program_id(1)
    nk = pl.num_programs(1)

    @pl.when(k == 0)
    def _init():
        max_acc[...] = jnp.full_like(max_acc, -jnp.inf)
        sum_acc[...] = jnp.zeros_like(sum_acc)

    def _accumulate(masked):
        x = x_ref[...].astype(jnp.float32)                  # (TN, C, THW)
        if masked:
            # Only the last spatial block can read past HW; `rem` valid lanes.
            lane = jax.lax.broadcasted_iota(
                jnp.int32, (x.shape[1], x.shape[2]), 1)     # (C, THW)
            valid = lane < rem
            x_max = jnp.where(valid, x, -jnp.inf)
            x_sum = jnp.where(valid, x, 0.0)
        else:
            x_max = x
            x_sum = x
        max_acc[...] = jnp.maximum(max_acc[...], jnp.max(x_max, axis=-1))
        sum_acc[...] = sum_acc[...] + jnp.sum(x_sum, axis=-1)

    if needs_mask:
        # Mask work only on the final (partial) spatial step.
        @pl.when(k < nk - 1)
        def _full_blocks():
            _accumulate(masked=False)

        @pl.when(k == nk - 1)
        def _partial_block():
            _accumulate(masked=True)
    else:
        _accumulate(masked=False)

    @pl.when(k == nk - 1)
    def _finalize():
        mx = max_acc[...]                                   # (TN, C)
        av = sum_acc[...] * jnp.float32(1.0 / hw)           # (TN, C)
        # Split-weight matmuls == Linear(cat([max, avg], dim=1)) without the
        # lane-axis concatenate.
        y = jnp.dot(mx, wmax_ref[...], preferred_element_type=jnp.float32)
        y = y + jnp.dot(av, wavg_ref[...], preferred_element_type=jnp.float32)
        y = y + b_ref[...]
        o_ref[...] = y.astype(o_ref.dtype)


def global_avg_max_pooling(x, weight, bias, *, spatial_block_budget_bytes=16 << 20):
    """x: (N, C, H, W); weight: (out_ch, 2*C); bias: (out_ch,)."""
    N, C, H, W = x.shape
    out_ch, in_ch = weight.shape
    assert in_ch == 2 * C, "Linear in_ch must equal 2 * channels (pool=1)"

    hw = H * W
    x_flat = x.reshape(N, C, hw)                            # glue reshape

    itemsize = jnp.dtype(x.dtype).itemsize
    padded_c = _round_up(C, 8)       # sublane padding of each (C, thw) slice
    hw_pad = _round_up(hw, 128)      # lane padding of the spatial axis

    # Budget = double-buffered x slab per grid step; capped so it is v7x-safe
    # (64 MiB physical / 32 MiB scoped default).
    budget = min(int(spatial_block_budget_bytes), 32 << 20)

    def x_block_bytes(tn_, thw_lanes):
        return 2 * tn_ * padded_c * thw_lanes * itemsize    # 2 = double buffer

    # ---- batch tile.
    tn = N if N <= 8 else 8

    if x_block_bytes(tn, hw_pad) <= budget:
        # Full spatial extent in a single block per step.
        thw = hw
        if N > 8:
            # Grow tn (multiples of 8) to amortize the ~0.35us per-step overhead,
            # but keep >= 2 batch blocks so the 'parallel' axis shards across
            # v7x's two TensorCores.
            tn_fit = (budget // 2) // (padded_c * hw_pad * itemsize)
            tn_fit = max(8, (tn_fit // 8) * 8)
            tn_cap = max(8, _round_up(pl.cdiv(N, 2), 8))    # always < N for N > 8
            tn = min(tn_fit, tn_cap, _round_up(N, 8))
    else:
        # Tile the spatial axis. Floor at 512 lanes so each strided-DMA row is
        # >= 2 KiB (f32) and the HBM read stays near peak bandwidth.
        max_thw = (budget // 2) // (tn * padded_c * itemsize)
        thw = max(512, (max_thw // 128) * 128)
        if thw >= hw:
            thw = hw

    n_b = pl.cdiv(N, tn)
    n_k = pl.cdiv(hw, thw)
    needs_mask = (hw % thw) != 0
    rem = hw - (n_k - 1) * thw       # valid lanes in the last spatial block

    # ---- split the Linear weight (torch.cat order: [max, avg]) -> two halves.
    w_max = jnp.asarray(weight[:, :C].T, dtype=jnp.float32)    # (C, out_ch)
    w_avg = jnp.asarray(weight[:, C:].T, dtype=jnp.float32)    # (C, out_ch)
    b2d = bias.reshape(1, out_ch).astype(jnp.float32)

    kernel = functools.partial(_gap_linear_kernel,
                               hw=hw, rem=rem, needs_mask=needs_mask)

    flops = 2 * N * C * hw + 2 * N * (2 * C) * out_ch
    bytes_accessed = (N * C * hw * itemsize
                      + 2 * C * out_ch * 4 + out_ch * 4
                      + N * out_ch * itemsize)

    # Explicit scoped-VMEM limit: covers the x double-buffer + weights/bias/out/
    # scratch on every generation (v5e default is only 16 MiB), <= 48 MiB for v7x.
    vmem_limit_bytes = int(min(48 << 20, max(budget + (8 << 20), 24 << 20)))

    return pl.pallas_call(
        kernel,
        out_shape=jax.ShapeDtypeStruct((N, out_ch), x.dtype),
        grid_spec=pltpu.PrefetchScalarGridSpec(
            num_scalar_prefetch=0,
            grid=(n_b, n_k),
            in_specs=[
                pl.BlockSpec((tn, C, thw), lambda i, k: (i, 0, k)),
                pl.BlockSpec((C, out_ch), lambda i, k: (0, 0)),
                pl.BlockSpec((C, out_ch), lambda i, k: (0, 0)),
                pl.BlockSpec((1, out_ch), lambda i, k: (0, 0)),
            ],
            out_specs=pl.BlockSpec((tn, out_ch), lambda i, k: (i, 0)),
            scratch_shapes=[
                pltpu.VMEM((tn, C), jnp.float32),   # running max
                pltpu.VMEM((tn, C), jnp.float32),   # running sum
            ],
        ),
        compiler_params=pltpu.CompilerParams(
            dimension_semantics=("parallel", "arbitrary"),
            vmem_limit_bytes=vmem_limit_bytes),
        cost_estimate=pl.CostEstimate(
            flops=flops, transcendentals=0, bytes_accessed=bytes_accessed),
    )(x_flat, w_max, w_avg, b2d)


def _reference(x, weight, bias):
    mx = jnp.max(x, axis=(2, 3))
    av = jnp.mean(x, axis=(2, 3))
    pooled = jnp.concatenate([mx, av], axis=1)
    return pooled @ weight.T + bias


if __name__ == "__main__":
    # Module defaults: in_ch=20, out_ch=30, pool=1  =>  feature-map channels C = 10
    C = 10
    in_ch, out_ch = 2 * C, 30

    key = jax.random.PRNGKey(0)
    kx, kw, kb, kx2, kx3, kx4 = jax.random.split(key, 6)
    bound = 1.0 / (in_ch ** 0.5)
    weight = jax.random.uniform(kw, (out_ch, in_ch), minval=-bound, maxval=bound,
                                dtype=jnp.float32)
    bias = jax.random.uniform(kb, (out_ch,), minval=-bound, maxval=bound,
                              dtype=jnp.float32)

    # 1) Base case: N=2, 16x16 -> one batch block, one spatial block.
    x = jax.random.normal(kx, (2, C, 16, 16), dtype=jnp.float32)
    out = jax.block_until_ready(global_avg_max_pooling(x, weight, bias))
    assert out.shape == (2, out_ch)
    assert jnp.allclose(out, _reference(x, weight, bias), atol=1e-5, rtol=1e-5)

    # 2) Spatial tiling (running max/sum accumulators): hw=1024 with a tiny
    #    budget -> thw=512, 2 spatial steps, no mask.
    x2 = jax.random.normal(kx2, (2, C, 32, 32), dtype=jnp.float32)
    out2 = jax.block_until_ready(
        global_avg_max_pooling(x2, weight, bias, spatial_block_budget_bytes=128 << 10))
    assert jnp.allclose(out2, _reference(x2, weight, bias), atol=1e-5, rtol=1e-5)

    # 3) Masked partial last spatial block: hw=1089 -> thw=512, 3 steps, rem=65.
    x3 = jax.random.normal(kx3, (2, C, 33, 33), dtype=jnp.float32)
    out3 = jax.block_until_ready(
        global_avg_max_pooling(x3, weight, bias, spatial_block_budget_bytes=128 << 10))
    assert jnp.allclose(out3, _reference(x3, weight, bias), atol=1e-5, rtol=1e-5)

    # 4) Partial batch block + 2 parallel batch blocks: N=9, tn=8 -> n_b=2
    #    (exercises the ragged batch write-back flagged in the review).
    x4 = jax.random.normal(kx4, (9, C, 16, 16), dtype=jnp.float32)
    out4 = jax.block_until_ready(global_avg_max_pooling(x4, weight, bias))
    assert out4.shape == (9, out_ch)
    assert jnp.allclose(out4, _reference(x4, weight, bias), atol=1e-5, rtol=1e-5)

    print("KERNEL_OK")
</pallas_src>

<mosaic_0001>
module attributes {stable_mosaic.version = 11 : i64} {
  func.func @_gap_linear_kernel(%arg0: i32, %arg1: i32, %arg2: memref<2x10x256xf32, #tpu.memory_space<vmem>>, %arg3: memref<10x30xf32, #tpu.memory_space<vmem>>, %arg4: memref<10x30xf32, #tpu.memory_space<vmem>>, %arg5: memref<1x30xf32, #tpu.memory_space<vmem>>, %arg6: memref<2x30xf32, #tpu.memory_space<vmem>>, %arg7: memref<2x10xf32, #tpu.memory_space<vmem>>, %arg8: memref<2x10xf32, #tpu.memory_space<vmem>>) attributes {dimension_semantics = [#tpu.dimension_semantics<parallel>, #tpu.dimension_semantics<arbitrary>], iteration_bounds = array<i64: 1, 1>, scalar_prefetch = 0 : i64, scratch_operands = 2 : i64, tpu.core_type = #tpu.core_type<tc>, window_params = [{transform_indices = @transform_0, window_bounds = array<i64: 2, 10, 256>}, {pipeline_mode = #tpu.pipeline_mode<synchronous>, transform_indices = @transform_1, window_bounds = array<i64: 10, 30>}, {pipeline_mode = #tpu.pipeline_mode<synchronous>, transform_indices = @transform_2, window_bounds = array<i64: 10, 30>}, {pipeline_mode = #tpu.pipeline_mode<synchronous>, transform_indices = @transform_3, window_bounds = array<i64: 1, 30>}, {transform_indices = @transform_4, window_bounds = array<i64: 2, 30>}]} {
    %c0_i32 = arith.constant 0 : i32
    %0 = arith.cmpi eq, %arg1, %c0_i32 : i32
    %1 = arith.extui %0 : i1 to i32
    %c0_i32_0 = arith.constant 0 : i32
    %2 = arith.cmpi ne, %1, %c0_i32_0 : i32
    scf.if %2 {
      %cst_14 = arith.constant 0xFF800000 : f32
      %15 = vector.broadcast %cst_14 : f32 to vector<2x10xf32>
      %c0_15 = arith.constant 0 : index
      %c0_16 = arith.constant 0 : index
      %16 = vector.load %arg7[%c0_15, %c0_16] : memref<2x10xf32, #tpu.memory_space<vmem>>, vector<2x10xf32>
      tpu.vector_store %arg7[%c0_15, %c0_16], %15 {strides = array<i32>} : memref<2x10xf32, #tpu.memory_space<vmem>>, vector<2x10xf32>,
      %cst_17 = arith.constant 0.000000e+00 : f32
      %17 = vector.broadcast %cst_17 : f32 to vector<2x10xf32>
      %c0_18 = arith.constant 0 : index
      %c0_19 = arith.constant 0 : index
      %18 = vector.load %arg8[%c0_18, %c0_19] : memref<2x10xf32, #tpu.memory_space<vmem>>, vector<2x10xf32>
      tpu.vector_store %arg8[%c0_18, %c0_19], %17 {strides = array<i32>} : memref<2x10xf32, #tpu.memory_space<vmem>>, vector<2x10xf32>,
    } else {
    }
    %c0 = arith.constant 0 : index
    %c0_1 = arith.constant 0 : index
    %c0_2 = arith.constant 0 : index
    %3 = vector.load %arg2[%c0, %c0_1, %c0_2] : memref<2x10x256xf32, #tpu.memory_space<vmem>>, vector<2x10x256xf32>
    %c0_3 = arith.constant 0 : index
    %c0_4 = arith.constant 0 : index
    %4 = vector.load %arg7[%c0_3, %c0_4] : memref<2x10xf32, #tpu.memory_space<vmem>>, vector<2x10xf32>
    %cst = arith.constant dense<0xFF800000> : vector<2x10xf32>
    %5 = vector.multi_reduction <maximumf>, %3, %cst [2] : vector<2x10x256xf32> to vector<2x10xf32>
    %6 = arith.maximumf %4, %5 : vector<2x10xf32>
    %c0_5 = arith.constant 0 : index
    %c0_6 = arith.constant 0 : index
    %7 = vector.load %arg7[%c0_5, %c0_6] : memref<2x10xf32, #tpu.memory_space<vmem>>, vector<2x10xf32>
    tpu.vector_store %arg7[%c0_5, %c0_6], %6 {strides = array<i32>} : memref<2x10xf32, #tpu.memory_space<vmem>>, vector<2x10xf32>,
    %c0_7 = arith.constant 0 : index
    %c0_8 = arith.constant 0 : index
    %8 = vector.load %arg8[%c0_7, %c0_8] : memref<2x10xf32, #tpu.memory_space<vmem>>, vector<2x10xf32>
    %cst_9 = arith.constant dense<0.000000e+00> : vector<2x10xf32>
    %9 = vector.multi_reduction <add>, %3, %cst_9 [2] : vector<2x10x256xf32> to vector<2x10xf32>
    %10 = arith.addf %8, %9 : vector<2x10xf32>
    %c0_10 = arith.constant 0 : index
    %c0_11 = arith.constant 0 : index
    %11 = vector.load %arg8[%c0_10, %c0_11] : memref<2x10xf32, #tpu.memory_space<vmem>>, vector<2x10xf32>
    tpu.vector_store %arg8[%c0_10, %c0_11], %10 {strides = array<i32>} : memref<2x10xf32, #tpu.memory_space<vmem>>, vector<2x10xf32>,
    %c0_i32_12 = arith.constant 0 : i32
    %12 = arith.cmpi eq, %arg1, %c0_i32_12 : i32
    %13 = arith.extui %12 : i1 to i32
    %c0_i32_13 = arith.constant 0 : i32
    %14 = arith.cmpi ne, %13, %c0_i32_13 : i32
    scf.if %14 {
      %c0_14 = arith.constant 0 : index
      %c0_15 = arith.constant 0 : index
      %15 = vector.load %arg7[%c0_14, %c0_15] : memref<2x10xf32, #tpu.memory_space<vmem>>, vector<2x10xf32>
      %c0_16 = arith.constant 0 : index
      %c0_17 = arith.constant 0 : index
      %16 = vector.load %arg8[%c0_16, %c0_17] : memref<2x10xf32, #tpu.memory_space<vmem>>, vector<2x10xf32>
      %cst_18 = arith.constant 3.906250e-03 : f32
      %17 = vector.broadcast %cst_18 : f32 to vector<2x10xf32>
      %18 = arith.mulf %16, %17 : vector<2x10xf32>
      %c0_19 = arith.constant 0 : index
      %c0_20 = arith.constant 0 : index
      %19 = vector.load %arg3[%c0_19, %c0_20] : memref<10x30xf32, #tpu.memory_space<vmem>>, vector<10x30xf32>
      %cst_21 = arith.constant dense<0.000000e+00> : vector<2x30xf32>
      %20 = tpu.matmul %15, %19, %cst_21 {dimension_numbers = #tpu.dot_dimension_numbers<[1], [0], [0], [1], [0, 0, 1, 1], [], []>} : vector<2x10xf32>, vector<10x30xf32>, vector<2x30xf32> -> vector<2x30xf32>
      %c0_22 = arith.constant 0 : index
      %c0_23 = arith.constant 0 : index
      %21 = vector.load %arg4[%c0_22, %c0_23] : memref<10x30xf32, #tpu.memory_space<vmem>>, vector<10x30xf32>
      %cst_24 = arith.constant dense<0.000000e+00> : vector<2x30xf32>
      %22 = tpu.matmul %18, %21, %cst_24 {dimension_numbers = #tpu.dot_dimension_numbers<[1], [0], [0], [1], [0, 0, 1, 1], [], []>} : vector<2x10xf32>, vector<10x30xf32>, vector<2x30xf32> -> vector<2x30xf32>
      %23 = arith.addf %20, %22 : vector<2x30xf32>
      %c0_25 = arith.constant 0 : index
      %c0_26 = arith.constant 0 : index
      %24 = vector.load %arg5[%c0_25, %c0_26] : memref<1x30xf32, #tpu.memory_space<vmem>>, vector<1x30xf32>
      %25 = vector.broadcast %24 : vector<1x30xf32> to vector<2x30xf32>
      %26 = arith.addf %23, %25 : vector<2x30xf32>
      %c0_27 = arith.constant 0 : index
      %c0_28 = arith.constant 0 : index
      %27 = vector.load %arg6[%c0_27, %c0_28] : memref<2x30xf32, #tpu.memory_space<vmem>>, vector<2x30xf32>
      tpu.vector_store %arg6[%c0_27, %c0_28], %26 {strides = array<i32>} : memref<2x30xf32, #tpu.memory_space<vmem>>, vector<2x30xf32>,
    } else {
    }
    return
  }
  func.func @transform_0(%arg0: i32, %arg1: i32) -> (i32, i32, i32) {
    %c0_i32 = arith.constant 0 : i32
    %c0_i32_0 = arith.constant 0 : i32
    return %arg0, %c0_i32, %arg1 : i32, i32, i32
  }
  func.func @transform_1(%arg0: i32, %arg1: i32) -> (i32, i32) {
    %c0_i32 = arith.constant 0 : i32
    %c0_i32_0 = arith.constant 0 : i32
    %c0_i32_1 = arith.constant 0 : i32
    return %c0_i32, %c0_i32_0 : i32, i32
  }
  func.func @transform_2(%arg0: i32, %arg1: i32) -> (i32, i32) {
    %c0_i32 = arith.constant 0 : i32
    %c0_i32_0 = arith.constant 0 : i32
    %c0_i32_1 = arith.constant 0 : i32
    return %c0_i32, %c0_i32_0 : i32, i32
  }
  func.func @transform_3(%arg0: i32, %arg1: i32) -> (i32, i32) {
    %c0_i32 = arith.constant 0 : i32
    %c0_i32_0 = arith.constant 0 : i32
    %c0_i32_1 = arith.constant 0 : i32
    return %c0_i32, %c0_i32_0 : i32, i32
  }
  func.func @transform_4(%arg0: i32, %arg1: i32) -> (i32, i32) {
    %c0_i32 = arith.constant 0 : i32
    %c0_i32_0 = arith.constant 0 : i32
    return %arg0, %c0_i32 : i32, i32
  }
}

</mosaic_0001>

<llo_original>
// kernel: tpu_custom_call.1
$region0: #{tpu_custom_call.1}
  #allocation0 [shape = 'u32[]', space=smem, size = 0x4, offset = 0x4, fixed_abs, tag = 'smem constant byte address 0x4 - core index']
  #allocation1 [shape = 'u32[144,128]{1,0:T(1,128)}', space=vmem, size = 0x12000, scoped, tag = 'internal scratch']
  #allocation2 [shape = 'f32[2,10]{1,0:T(2,128)}', space=vmem, size = 0x400, scoped, tag = 'scratch operand']
  #allocation3 [shape = 'f32[2,10]{1,0:T(2,128)}', space=vmem, size = 0x400, scoped, tag = 'scratch operand']
  %s0 = inlined_call_operand.vmem [shape: f32[2,10,256], index: 0, kind: input, shape index: {}]
  %s1 = inlined_call_operand.vmem [shape: f32[10,30], index: 1, kind: input, shape index: {}]
  %s2 = inlined_call_operand.vmem [shape: f32[10,30], index: 2, kind: input, shape index: {}]
  %s3 = inlined_call_operand.vmem [shape: f32[1,30], index: 3, kind: input, shape index: {}]
  %s4 = inlined_call_operand.hbm [shape: f32[2,30], index: 4, kind: output, shape index: {}]
  %s5 = sld [smem:[#allocation0]]
  $region34: #{tpu_custom_call.1} parent=0
    _
  %s7 = ssub.s32 1, %s5
  %s8 = scalar_select 0, %s7, %s5
  $region1: #{tpu_custom_call.1} parent=0
    #allocation4 [shape = 'u8[1024]{0}', space=vmem, size = 0x400, scoped, tag = 'output window, operand 0, single buffered']
    #allocation5 [shape = 's32[1]{0}', space=sflag, size = 0x4, scoped, tag = 'scoped memory for tpu_custom_call.1']
    %9 = vsyncpa [#allocation5], 0
    // Predicated region
    $region2: #{tpu_custom_call.1} parent=1 // pred_check
      _
    $region3: #{tpu_custom_call.1} parent=1 // pred_check_branch
      %11 = sbr.rel (0) target = $region5
    $region4: #{tpu_custom_call.1} parent=1 // pred_region
      _
    $region5: #{tpu_custom_call.1} parent=1 // pred_fallthru
      _
    // Predicated region
    $region6: #{tpu_custom_call.1} parent=1 // pred_check
      _
    $region7: #{tpu_custom_call.1} parent=1 // pred_check_branch
      %13 = sbr.rel (0) target = $region9
    $region8: #{tpu_custom_call.1} parent=1 // pred_region
      _
    $region9: #{tpu_custom_call.1} parent=1 // pred_fallthru
      _
    // Predicated region
    $region10: #{tpu_custom_call.1} parent=1 // pred_check
      _
    $region11: #{tpu_custom_call.1} parent=1 // pred_check_branch
      %15 = sbr.rel (0) target = $region13
    $region12: #{tpu_custom_call.1} parent=1 // pred_region
      _
    $region13: #{tpu_custom_call.1} parent=1 // pred_fallthru
      _
    // Predicated region
    $region14: #{tpu_custom_call.1} parent=1 // pred_check
      _
    $region15: #{tpu_custom_call.1} parent=1 // pred_check_branch
      %17 = sbr.rel (0) target = $region17
    $region16: #{tpu_custom_call.1} parent=1 // pred_region
      _
    $region17: #{tpu_custom_call.1} parent=1 // pred_fallthru
      _
    %p18 = scmp.eq.s32.totalorder 0, 0
    // Predicated region
    $region18: #{tpu_custom_call.1} parent=1 // pred_check
      %p19 = pneg %p18
    $region19: #{tpu_custom_call.1} parent=1 // pred_check_branch
      %21 = sbr.rel (%p19) target = $region21
    $region20: #{tpu_custom_call.1} parent=1 // pred_region
      %vm22 = vcmask 74752
      %23 = vst.msk [vmem:[#allocation2] sm:$0x3] %vm22, -inf
      %24 = vst.msk [vmem:[#allocation3] sm:$0x3] %vm22, 0.0
    $region21: #{tpu_custom_call.1} parent=1 // pred_fallthru
      _
    %v25 = vld [vmem:[%s0] sm:$0xff]
    %v26 = vld [vmem:[%s0 + $0x8] sm:$0xff]
    %v27 = vld [vmem:[%s0 + $0x10] sm:$0x3]
    %v28 = vld [vmem:[%s0 + $0x18] sm:$0x3]
    %v29 = vld [vmem:[%s0 + $0x20] sm:$0xff]
    %v30 = vld [vmem:[%s0 + $0x28] sm:$0xff]
    %v31 = vld [vmem:[%s0 + $0x30] sm:$0x3]
    %v32 = vld [vmem:[%s0 + $0x38] sm:$0x3]
    %v33 = vld [vmem:[#allocation2] sm:$0x3]
    %v34 = vmax.f32 %v25, %v26
    %35 = vmax.xlane.f32.xlu0 %v34
    %v36 = vpop.xlane.xlu0 %35
    %vm37 = vcmask 1041408
    %v38 = vsel %vm37, %v27, -inf
    %v39 = vsel %vm37, %v28, -inf
    %v40 = vmax.f32 %v38, %v39
    %41 = vmax.xlane.f32.xlu0 %v40
    %v42 = vpop.xlane.xlu0 %41
    %v43 = vmax.f32 %v29, %v30
    %44 = vmax.xlane.f32.xlu0 %v43
    %v45 = vpop.xlane.xlu0 %44
    %v46 = vsel %vm37, %v31, -inf
    %v47 = vsel %vm37, %v32, -inf
    %v48 = vmax.f32 %v46, %v47
    %49 = vmax.xlane.f32.xlu0 %v48
    %v50 = vpop.xlane.xlu0 %49
    %v55 = vlaneseq
    %v56 = vand.u32 %v55, 127
    %v57 = vlaneseq
    %v58 = vshrl.u32 %v57, 7
    %v59 = vsub.s32 %v56, %v58
    %v60 = vrot.slane %v36, %v59
    %v61 = vadd.s32 %v56, 4294967288
    %v62 = vlaneseq
    %v63 = vshrl.u32 %v62, 7
    %v64 = vsub.s32 %v61, %v63
    %v65 = vrot.slane %v42, %v64
    %vm66 = vcmask 130112
    %v67 = vsel %vm66, %v65, %v60
    %v68 = vlaneseq
    %v69 = vshrl.u32 %v68, 7
    %v70 = vsub.s32 %v56, %v69
    %v71 = vrot.slane %v45, %v70
    %v72 = vlaneseq
    %v73 = vshrl.u32 %v72, 7
    %v74 = vsub.s32 %v61, %v73
    %v75 = vrot.slane %v50, %v74
    %v76 = vsel %vm66, %v75, %v71
    %vm77 = vcmask 1041409
    %v78 = vsel %vm77, %v76, %v67
    %v80 = vmax.f32 %v33, %v78
    %vm81 = vcmask 74752
    %82 = vst.msk [vmem:[#allocation2] sm:$0x3] %vm81, %v80
    %v83 = vld [vmem:[#allocation3] sm:$0x3]
    %v84 = vadd.f32 %v25, %v26
    %85 = vadd.xlane.f32.xlu0 %v84
    %v86 = vpop.xlane.xlu0 %85
    %v87 = vsel %vm37, %v27, 0.0
    %v88 = vsel %vm37, %v28, 0.0
    %v89 = vadd.f32 %v87, %v88
    %90 = vadd.xlane.f32.xlu0 %v89
    %v91 = vpop.xlane.xlu0 %90
    %v92 = vadd.f32 %v29, %v30
    %93 = vadd.xlane.f32.xlu0 %v92
    %v94 = vpop.xlane.xlu0 %93
    %v95 = vsel %vm37, %v31, 0.0
    %v96 = vsel %vm37, %v32, 0.0
    %v97 = vadd.f32 %v95, %v96
    %98 = vadd.xlane.f32.xlu0 %v97
    %v99 = vpop.xlane.xlu0 %98
    %v104 = vlaneseq
    %v105 = vshrl.u32 %v104, 7
    %v106 = vsub.s32 %v56, %v105
    %v107 = vrot.slane %v86, %v106
    %v108 = vlaneseq
    %v109 = vshrl.u32 %v108, 7
    %v110 = vsub.s32 %v61, %v109
    %v111 = vrot.slane %v91, %v110
    %v112 = vsel %vm66, %v111, %v107
    %v113 = vlaneseq
    %v114 = vshrl.u32 %v113, 7
    %v115 = vsub.s32 %v56, %v114
    %v116 = vrot.slane %v94, %v115
    %v117 = vlaneseq
    %v118 = vshrl.u32 %v117, 7
    %v119 = vsub.s32 %v61, %v118
    %v120 = vrot.slane %v99, %v119
    %v121 = vsel %vm66, %v120, %v116
    %v122 = vsel %vm77, %v121, %v112
    %v124 = vadd.f32 %v83, %v122
    %125 = vst.msk [vmem:[#allocation3] sm:$0x3] %vm81, %v124
    // Predicated region
    $region22: #{tpu_custom_call.1} parent=1 // pred_check
      %p126 = pneg %p18
    $region23: #{tpu_custom_call.1} parent=1 // pred_check_branch
      %128 = sbr.rel (%p126) target = $region25
    $region24: #{tpu_custom_call.1} parent=1 // pred_region
      %v129 = vld [vmem:[#allocation2] sm:$0x3]
      %v130 = vld [vmem:[#allocation3] sm:$0x3]
      %v131 = vmul.f32 %v130, 0.00390625
      %v132 = vld [vmem:[%s1] sm:$0xff]
      %v133 = vld [vmem:[%s1 + $0x8] sm:$0x3]
      %v134 = vld [vmem:[%s2] sm:$0xff]
      %v135 = vld [vmem:[%s2 + $0x8] sm:$0x3]
      %vm136 = vcmask 80896
      %v138 = vsel %vm136, %v131, 0
      %v141 = vsel %vm37, %v135, 0
      %143 = vmatprep.subr.mxu0 0.0
      %144 = vmatpush1.msra.mxu0 %v134
      %145 = vmatprep.subr.mxu0 0.0
      %146 = vmatpush1.msra.mxu0 %v141
      %147 = vmatprep.subr.mxu0 0.0
      %148 = vmatpush1.msra.mxu0 0.0
      %149 = vmatprep.subr.mxu0 0.0
      %150 = vmatpush1.msra.mxu0 0.0
      %151 = vmatprep.subr.mxu0 0.0
      %152 = vmatpush1.msra.mxu0 0.0
      %153 = vmatprep.subr.mxu0 0.0
      %154 = vmatpush1.msra.mxu0 0.0
      %155 = vmatprep.subr.mxu0 0.0
      %156 = vmatpush1.msra.mxu0 0.0
      %157 = vmatprep.subr.mxu0 0.0
      %158 = vmatpush1.msra.mxu0 0.0
      %159 = vmatprep.subr.mxu0 0.0
      %160 = vmatpush1.msra.mxu0 0.0
      %161 = vmatprep.subr.mxu0 0.0
      %162 = vmatpush1.msra.mxu0 0.0
      %163 = vmatprep.subr.mxu0 0.0
      %164 = vmatpush1.msra.mxu0 0.0
      %165 = vmatprep.subr.mxu0 0.0
      %166 = vmatpush1.msra.mxu0 0.0
      %167 = vmatprep.subr.mxu0 0.0
      %168 = vmatpush1.msra.mxu0 0.0
      %169 = vmatprep.subr.mxu0 0.0
      %170 = vmatpush1.msra.mxu0 0.0
      %171 = vmatprep.subr.mxu0 0.0
      %172 = vmatpush1.msra.mxu0 0.0
      %173 = vmatprep.subr.mxu0 0.0
      %174 = vmatpush1.msra.mxu0 0.0
      %175 = vmatprep.subr.mxu0 0.0
      %176 = vmatpush1.msra.mxu0 0.0
      %177 = vmatprep.subr.mxu0 0.0
      %178 = vmatpush1.msra.mxu0 0.0
      %179 = vmatprep.subr.mxu0 0.0
      %180 = vmatpush1.msra.mxu0 0.0
      %181 = vmatprep.subr.mxu0 0.0
      %182 = vmatpush1.msra.mxu0 0.0
      %183 = vmatprep.subr.mxu0 0.0
      %184 = vmatpush1.msra.mxu0 0.0
      %185 = vmatprep.subr.mxu0 0.0
      %186 = vmatpush1.msra.mxu0 0.0
      %187 = vmatprep.subr.mxu0 0.0
      %188 = vmatpush1.msra.mxu0 0.0
      %189 = vmatprep.subr.mxu0 0.0
      %190 = vmatpush1.msra.mxu0 0.0
      %191 = vmatprep.subr.mxu0 0.0
      %192 = vmatpush1.msra.mxu0 0.0
      %193 = vmatprep.subr.mxu0 0.0
      %194 = vmatpush1.msra.mxu0 0.0
      %195 = vmatprep.subr.mxu0 0.0
      %196 = vmatpush1.msra.mxu0 0.0
      %197 = vmatprep.subr.mxu0 0.0
      %198 = vmatpush1.msra.mxu0 0.0
      %199 = vmatprep.subr.mxu0 0.0
      %200 = vmatpush1.msra.mxu0 0.0
      %201 = vmatprep.subr.mxu0 0.0
      %202 = vmatpush1.msra.mxu0 0.0
      %203 = vmatprep.subr.mxu0 0.0
      %204 = vmatpush1.msra.mxu0 0.0
      %205 = vmatprep.subr.mxu0 0.0
      %206 = vmatpush1.msra.mxu0 0.0
      %207 = vmatprep.mubr.f32.mxu0 0.0
      %208 = vmatmul.mubr.f32.gmra.mrb[0].mxu0 %v138
      %v209 = vpop.f32.mrb[0].mxu0
      %v210 = vadd.f32 0.0, %v209
      %v211 = vpop.f32.mrb[0].mxu0
      %212 = vdwg.mxu0
      %v214 = vsel %vm136, %v129, 0
      %v217 = vsel %vm37, %v133, 0
      %219 = vmatprep.subr.mxu0 0.0
      %220 = vmatpush1.msra.mxu0 %v132
      %221 = vmatprep.subr.mxu0 0.0
      %222 = vmatpush1.msra.mxu0 %v217
      %223 = vmatprep.subr.mxu0 0.0
      %224 = vmatpush1.msra.mxu0 0.0
      %225 = vmatprep.subr.mxu0 0.0
      %226 = vmatpush1.msra.mxu0 0.0
      %227 = vmatprep.subr.mxu0 0.0
      %228 = vmatpush1.msra.mxu0 0.0
      %229 = vmatprep.subr.mxu0 0.0
      %230 = vmatpush1.msra.mxu0 0.0
      %231 = vmatprep.subr.mxu0 0.0
      %232 = vmatpush1.msra.mxu0 0.0
      %233 = vmatprep.subr.mxu0 0.0
      %234 = vmatpush1.msra.mxu0 0.0
      %235 = vmatprep.subr.mxu0 0.0
      %236 = vmatpush1.msra.mxu0 0.0
      %237 = vmatprep.subr.mxu0 0.0
      %238 = vmatpush1.msra.mxu0 0.0
      %239 = vmatprep.subr.mxu0 0.0
      %240 = vmatpush1.msra.mxu0 0.0
      %241 = vmatprep.subr.mxu0 0.0
      %242 = vmatpush1.msra.mxu0 0.0
      %243 = vmatprep.subr.mxu0 0.0
      %244 = vmatpush1.msra.mxu0 0.0
      %245 = vmatprep.subr.mxu0 0.0
      %246 = vmatpush1.msra.mxu0 0.0
      %247 = vmatprep.subr.mxu0 0.0
      %248 = vmatpush1.msra.mxu0 0.0
      %249 = vmatprep.subr.mxu0 0.0
      %250 = vmatpush1.msra.mxu0 0.0
      %251 = vmatprep.subr.mxu0 0.0
      %252 = vmatpush1.msra.mxu0 0.0
      %253 = vmatprep.subr.mxu0 0.0
      %254 = vmatpush1.msra.mxu0 0.0
      %255 = vmatprep.subr.mxu0 0.0
      %256 = vmatpush1.msra.mxu0 0.0
      %257 = vmatprep.subr.mxu0 0.0
      %258 = vmatpush1.msra.mxu0 0.0
      %259 = vmatprep.subr.mxu0 0.0
      %260 = vmatpush1.msra.mxu0 0.0
      %261 = vmatprep.subr.mxu0 0.0
      %262 = vmatpush1.msra.mxu0 0.0
      %263 = vmatprep.subr.mxu0 0.0
      %264 = vmatpush1.msra.mxu0 0.0
      %265 = vmatprep.subr.mxu0 0.0
      %266 = vmatpush1.msra.mxu0 0.0
      %267 = vmatprep.subr.mxu0 0.0
      %268 = vmatpush1.msra.mxu0 0.0
      %269 = vmatprep.subr.mxu0 0.0
      %270 = vmatpush1.msra.mxu0 0.0
      %271 = vmatprep.subr.mxu0 0.0
      %272 = vmatpush1.msra.mxu0 0.0
      %273 = vmatprep.subr.mxu0 0.0
      %274 = vmatpush1.msra.mxu0 0.0
      %275 = vmatprep.subr.mxu0 0.0
      %276 = vmatpush1.msra.mxu0 0.0
      %277 = vmatprep.subr.mxu0 0.0
      %278 = vmatpush1.msra.mxu0 0.0
      %279 = vmatprep.subr.mxu0 0.0
      %280 = vmatpush1.msra.mxu0 0.0
      %281 = vmatprep.subr.mxu0 0.0
      %282 = vmatpush1.msra.mxu0 0.0
      %283 = vmatprep.mubr.f32.mxu0 0.0
      %284 = vmatmul.mubr.f32.gmra.mrb[0].mxu0 %v214
      %v285 = vpop.f32.mrb[0].mxu0
      %v286 = vadd.f32 %v210, %v285
      %v287 = vpop.f32.mrb[0].mxu0
      %288 = vdwg.mxu0
      %v289 = vld [vmem:[%s3] sm:$0x1]
      %v291 = vlaneseq
      %v292 = vshrl.u32 %v291, 7
      %v293 = vsub.s32 0, %v292
      %v294 = vrot.slane %v289, %v293
      %v296 = vadd.f32 %v286, %v294
      %vm297 = vcmask 238592
      %298 = vst.msk [vmem:[#allocation4] sm:$0x3] %vm297, %v296
    $region25: #{tpu_custom_call.1} parent=1 // pred_fallthru
      _
    // Predicated region
    $region26: #{tpu_custom_call.1} parent=1 // pred_check
      _
    $region27: #{tpu_custom_call.1} parent=1 // pred_check_branch
      %300 = sbr.rel (0) target = $region29
    $region28: #{tpu_custom_call.1} parent=1 // pred_region
      %s302 = ssub.s32 32, 32
      %303 = vsyncadd [#allocation5], %s302
      %s305 = sshll.u32 [#allocation4], 4
      %s306 = int_to_ptr.vmem [resolvable:$true] %s305
      %308 = dma.vmem_to_hbm [thread:$0]  %s306, 32, %s4, [#allocation5]
    $region29: #{tpu_custom_call.1} parent=1 // pred_fallthru
      _
    // Predicated region
    $region30: #{tpu_custom_call.1} parent=1 // pred_check
      _
    $region31: #{tpu_custom_call.1} parent=1 // pred_check_branch
      %310 = sbr.rel (0) target = $region33
    $region32: #{tpu_custom_call.1} parent=1 // pred_region
      %311 = dma.done [#allocation5], 32
    $region33: #{tpu_custom_call.1} parent=1 // pred_fallthru
      _
    %312 = vsyncpa [#allocation5], 1

</llo_original>
